<compile_context>
chip_gen: v6e
topology: v6e:2x2x1
jax: 0.10.0
libtpu: 0.0.40
codegen_flags: <defaults>
</compile_context>

<pallas_src>
import functools

import numpy as np
import jax
import jax.numpy as jnp
from jax.experimental import pallas as pl
from jax.experimental.pallas import tpu as pltpu


def _largest_divisor_leq(n, cap):
    cap = int(max(1, min(n, cap)))
    for d in range(cap, 0, -1):
        if n % d == 0:
            return d
    return 1


def _vmem_limit_bytes():
    """Generation-aware scoped-VMEM limit (~3/4 of physical)."""
    try:
        cap = int(pltpu.get_tpu_info().vmem_capacity_bytes)
    except Exception:
        cap = 64 * 2 ** 20          # conservative fallback (v7x per-TC VMEM)
    return max(32 * 2 ** 20, (cap * 3) // 4)


def _num_tensorcores():
    try:
        n = getattr(jax.devices()[0], "num_cores", None)
        if n:
            return max(1, int(n))
    except Exception:
        pass
    return 1


# ---------------------------------------------------------------------------
# Kernel 1: k_avg = sum_t(k0) / clamp(sum_t(mask), min=1)   (per coil)
#   Everything stays in the interleaved [.., nx, 2*ny] layout (elementwise).
#   grid = (ns, nt // tt); t is the last ('arbitrary') reduction axis and the
#   k-space sum accumulates directly in the output ref.
# ---------------------------------------------------------------------------
def _kavg_kernel(k0_ref, m_ref, avg_ref, msum_ref):
    t = pl.program_id(1)

    @pl.when(t == 0)
    def _():
        avg_ref[...] = jnp.zeros_like(avg_ref)
        msum_ref[...] = jnp.zeros_like(msum_ref)

    avg_ref[0] += jnp.sum(k0_ref[:, 0], axis=0)
    msum_ref[...] += jnp.sum(m_ref[:, 0], axis=0)

    @pl.when(t == pl.num_programs(1) - 1)
    def _():
        # Exact division (approx reciprocal removed: kernel 1 is DMA bound).
        avg_ref[0] = avg_ref[0] / jnp.maximum(msum_ref[...], 1.0)


# ---------------------------------------------------------------------------
# Kernel 2: data consistency + 2-D ortho inverse DFT + conj(sens) coil combine,
#           reduced over coils into resident output refs.  Per-frame fusion
#           keeps live temporaries at O(nx * 2ny) instead of O(bt * nx * 2ny).
# ---------------------------------------------------------------------------
def _main_kernel(kavg_ref, k0_ref, m_ref, sr_ref, si_ref,
                 wy_ref, wxr_ref, wxi_ref,
                 outr_ref, outi_ref, *, bt, ny, compute_dtype):
    s = pl.program_id(1)

    @pl.when(s == 0)
    def _():
        outr_ref[...] = jnp.zeros_like(outr_ref)
        outi_ref[...] = jnp.zeros_like(outi_ref)

    cd = compute_dtype
    ka = kavg_ref[0]            # (nx, 2*ny) interleaved, per-coil block, f32
    wy = wy_ref[...]            # (2*ny, 2*ny): interleaved-in -> [T_r | T_i] out
    wxr = wxr_ref[...]          # (nx, nx)
    wxi = wxi_ref[...]

    for b in range(bt):         # bt is a small static constant
        # --- data consistency (interleaved, f32, VPU) -----------------------
        m = m_ref[b, 0]                                     # (nx, 2*ny)
        dc = (1.0 - m) * ka + m * k0_ref[b, 0]

        # --- Wy stage: one MXU matmul, K = 2*ny; output is [T_r | T_i] ------
        tt_ = jnp.dot(dc.astype(cd), wy, preferred_element_type=jnp.float32)
        tt_c = tt_.astype(cd)                               # (nx, 2*ny)

        # --- Wx stage: two left matmuls on the lane-stacked slab ------------
        a = jnp.dot(wxr, tt_c, preferred_element_type=jnp.float32)
        b2 = jnp.dot(wxi, tt_c, preferred_element_type=jnp.float32)
        xr = a[:, :ny] - b2[:, ny:]                         # (nx, ny)
        xi = a[:, ny:] + b2[:, :ny]

        # --- z = x_avg * conj(sens), summed over coils into output refs -----
        s_r = sr_ref[b, 0]
        s_i = si_ref[b, 0]
        outr_ref[b] += xr * s_r + xi * s_i
        outi_ref[b] += xi * s_r - xr * s_i


def transform_data_in_xt_space_ta_mc(x, k0, mask, sensitivity,
                                     *, compute_dtype=jnp.bfloat16):
    """Pallas implementation of TransformDataInXtSpaceTA_mc.forward
    (divide_by_n=False, norm=True).

    x:           [nt, nx, ny, 2]        (unused in this branch, shape/API only)
    k0, mask, sensitivity: [nt, ns, nx, ny, 2]
    returns:     [nt, nx, ny, 2]
    compute_dtype: dtype of the MXU matmul inputs (f32 accumulation always).
    """
    # TODO(synk): divide_by_n=True branch (forward FFT of sens-weighted x) not implemented.
    del x
    f32 = jnp.float32
    k0 = k0.astype(f32)
    mask = mask.astype(f32)
    sensitivity = sensitivity.astype(f32)
    nt, ns, nx, ny, _ = k0.shape

    # Free reshape (trailing dims contiguous): keep k0/mask interleaved, no
    # de-interleave HBM pass for them at all.
    k0_il = k0.reshape(nt, ns, nx, 2 * ny)
    m_il = mask.reshape(nt, ns, nx, 2 * ny)
    # TODO(synk): accept planar sensitivity upstream (or fold this split into a
    # lane pair-swap via pltpu.roll inside kernel 2) to remove this last relayout.
    sr = sensitivity[..., 0]
    si = sensitivity[..., 1]

    vmem_limit = _vmem_limit_bytes()
    budget = max(vmem_limit - 8 * 2 ** 20, 4 * 2 ** 20)
    frame_bytes = nx * 2 * ny * 4           # one interleaved (nx, 2*ny) f32 frame
    num_cores = _num_tensorcores()

    # ---- kernel 1: temporally averaged k-space (t tiled into the grid) ----
    # 2 inputs, double-buffered: ~4 * tt * frame_bytes of VMEM.
    tt = _largest_divisor_leq(nt, max(1, budget // (4 * frame_bytes) - 2))
    kavg_il = pl.pallas_call(
        _kavg_kernel,
        out_shape=jax.ShapeDtypeStruct((ns, nx, 2 * ny), f32),
        grid_spec=pltpu.PrefetchScalarGridSpec(
            num_scalar_prefetch=0,
            grid=(ns, nt // tt),
            in_specs=[pl.BlockSpec((tt, 1, nx, 2 * ny), lambda s, t: (t, s, 0, 0)),
                      pl.BlockSpec((tt, 1, nx, 2 * ny), lambda s, t: (t, s, 0, 0))],
            out_specs=pl.BlockSpec((1, nx, 2 * ny), lambda s, t: (s, 0, 0)),
            scratch_shapes=[pltpu.VMEM((nx, 2 * ny), f32)],
        ),
        compiler_params=pltpu.CompilerParams(
            dimension_semantics=("parallel", "arbitrary"),
            vmem_limit_bytes=int(vmem_limit)),
    )(k0_il, m_il)

    # ---- ortho inverse-DFT weights (deterministic) -------------------------
    # Composite Wy: rows indexed by interleaved (y, comp); columns [0:ny] give
    # the real IFFT-along-y output, columns [ny:2ny] the imaginary part.
    jy = np.arange(ny)
    wy_c = np.exp(2j * np.pi * np.outer(jy, jy) / ny) / np.sqrt(ny)
    wyr_np = np.real(wy_c).astype(np.float32)
    wyi_np = np.imag(wy_c).astype(np.float32)
    wy_comb = np.zeros((2 * ny, 2 * ny), np.float32)
    wy_comb[0::2, :ny] = wyr_np
    wy_comb[1::2, :ny] = -wyi_np
    wy_comb[0::2, ny:] = wyi_np
    wy_comb[1::2, ny:] = wyr_np

    jx = np.arange(nx)
    wx_c = np.exp(2j * np.pi * np.outer(jx, jx) / nx) / np.sqrt(nx)
    wxr_np = np.real(wx_c).astype(np.float32)
    wxi_np = np.imag(wx_c).astype(np.float32)

    wy_j = jnp.asarray(wy_comb, dtype=compute_dtype)
    wxr_j = jnp.asarray(wxr_np, dtype=compute_dtype)
    wxi_j = jnp.asarray(wxi_np, dtype=compute_dtype)

    # ---- kernel 2: DC + 2-D IFFT + coil combine ----------------------------
    # VMEM model: (k0 + mask + sens) bt frames + kavg, double-buffered, plus
    # double-buffered outputs and ~10 frames of in-kernel temporaries.
    bt_cap = max(1, (budget // frame_bytes - 10) // 8)
    bt_cap = min(bt_cap, 16)                 # bound the unrolled per-frame loop
    if num_cores > 1 and nt >= 2:
        bt_cap = min(bt_cap, nt // 2)        # keep >=2 t-blocks for megacore
    bt = _largest_divisor_leq(nt, bt_cap)
    # TODO(synk): pad nt (and nx/ny to lane multiples) instead of falling back to
    # tiny divisors for awkward / prime sizes.

    kavg_spec = pl.BlockSpec((1, nx, 2 * ny), lambda t, s: (s, 0, 0))  # per-coil
    per_ts_il = pl.BlockSpec((bt, 1, nx, 2 * ny), lambda t, s: (t, s, 0, 0))
    per_ts_pl = pl.BlockSpec((bt, 1, nx, ny), lambda t, s: (t, s, 0, 0))
    w_y_spec = pl.BlockSpec((2 * ny, 2 * ny), lambda t, s: (0, 0))
    w_x_spec = pl.BlockSpec((nx, nx), lambda t, s: (0, 0))
    out_spec = pl.BlockSpec((bt, nx, ny), lambda t, s: (t, 0, 0))

    kernel2 = functools.partial(_main_kernel, bt=bt, ny=ny,
                                compute_dtype=compute_dtype)
    out_r, out_i = pl.pallas_call(
        kernel2,
        out_shape=(jax.ShapeDtypeStruct((nt, nx, ny), f32),
                   jax.ShapeDtypeStruct((nt, nx, ny), f32)),
        grid_spec=pltpu.PrefetchScalarGridSpec(
            num_scalar_prefetch=0,
            grid=(nt // bt, ns),
            in_specs=[kavg_spec,
                      per_ts_il, per_ts_il,      # k0, mask (interleaved)
                      per_ts_pl, per_ts_pl,      # sens real, imag (planar)
                      w_y_spec, w_x_spec, w_x_spec],
            out_specs=[out_spec, out_spec],
        ),
        compiler_params=pltpu.CompilerParams(
            dimension_semantics=("parallel", "arbitrary"),
            vmem_limit_bytes=int(vmem_limit)),
    )(kavg_il, k0_il, m_il, sr, si, wy_j, wxr_j, wxi_j)

    # Output is ns-times smaller than the inputs, so this interleave pass is cheap.
    return jnp.stack([out_r, out_i], axis=-1)


def _reference(x, k0, mask, sens):
    """Pure-JAX reference of the PyTorch forward (divide_by_n=False)."""
    del x
    k_avg = jnp.sum(k0, 0) / jnp.maximum(jnp.sum(mask, 0), 1.0)
    k_avg = jnp.broadcast_to(k_avg, k0.shape)
    k = (1.0 - mask) * k_avg + mask * k0
    kc = k[..., 0] + 1j * k[..., 1]
    xc = jnp.fft.ifft2(kc, axes=(-2, -1), norm="ortho")
    xr, xi = jnp.real(xc).astype(jnp.float32), jnp.imag(xc).astype(jnp.float32)
    sr, si = sens[..., 0], sens[..., 1]
    zr = xr * sr + xi * si
    zi = xi * sr - xr * si
    return jnp.stack([jnp.sum(zr, axis=1), jnp.sum(zi, axis=1)], axis=-1)


if __name__ == "__main__":
    key = jax.random.PRNGKey(0)
    nt, ns, nx, ny = 4, 4, 16, 16
    k1, k2, k3, k4 = jax.random.split(key, 4)

    x = jax.random.normal(k1, (nt, nx, ny, 2), jnp.float32)
    k0 = jax.random.normal(k2, (nt, ns, nx, ny, 2), jnp.float32)
    m = (jax.random.uniform(k3, (nt, ns, nx, ny, 1)) > 0.5).astype(jnp.float32)
    mask = jnp.concatenate([m, m], axis=-1)
    sens = jax.random.normal(k4, (nt, ns, nx, ny, 2), jnp.float32)

    ref = _reference(x, k0, mask, sens)
    scale = jnp.max(jnp.abs(ref))

    # Default path: bf16 MXU inputs with f32 accumulation.
    out = jax.block_until_ready(
        transform_data_in_xt_space_ta_mc(x, k0, mask, sens))
    assert out.shape == (nt, nx, ny, 2)
    err_bf16 = float(jnp.max(jnp.abs(out - ref)) / scale)
    if err_bf16 > 2.5e-2:
        raise AssertionError(f"bf16 path error too large: {err_bf16}")

    # Full-f32 matmul path: tight check of the kernel structure/arithmetic.
    out_f32 = jax.block_until_ready(
        transform_data_in_xt_space_ta_mc(x, k0, mask, sens,
                                         compute_dtype=jnp.float32))
    err_f32 = float(jnp.max(jnp.abs(out_f32 - ref)) / scale)
    if err_f32 > 1e-2:
        raise AssertionError(f"f32 path error too large: {err_f32}")

    print("KERNEL_OK")
</pallas_src>

<mosaic_0001>
module attributes {stable_mosaic.version = 11 : i64} {
  func.func @_kavg_kernel(%arg0: i32, %arg1: i32, %arg2: memref<4x1x16x32xf32, #tpu.memory_space<vmem>>, %arg3: memref<4x1x16x32xf32, #tpu.memory_space<vmem>>, %arg4: memref<1x16x32xf32, #tpu.memory_space<vmem>>, %arg5: memref<16x32xf32, #tpu.memory_space<vmem>>) attributes {dimension_semantics = [#tpu.dimension_semantics<parallel>, #tpu.dimension_semantics<arbitrary>], iteration_bounds = array<i64: 4, 1>, scalar_prefetch = 0 : i64, scratch_operands = 1 : i64, tpu.core_type = #tpu.core_type<tc>, window_params = [{transform_indices = @transform_0, window_bounds = array<i64: 4, 1, 16, 32>}, {transform_indices = @transform_1, window_bounds = array<i64: 4, 1, 16, 32>}, {transform_indices = @transform_2, window_bounds = array<i64: 1, 16, 32>}]} {
    %c0_i32 = arith.constant 0 : i32
    %0 = arith.cmpi eq, %arg1, %c0_i32 : i32
    %1 = arith.extui %0 : i1 to i32
    %c0_i32_0 = arith.constant 0 : i32
    %2 = arith.cmpi ne, %1, %c0_i32_0 : i32
    scf.if %2 {
      %cst_21 = arith.constant 0.000000e+00 : f32
      %21 = vector.broadcast %cst_21 : f32 to vector<1x16x32xf32>
      %c0_22 = arith.constant 0 : index
      %c0_23 = arith.constant 0 : index
      %c0_24 = arith.constant 0 : index
      %22 = vector.load %arg4[%c0_22, %c0_23, %c0_24] : memref<1x16x32xf32, #tpu.memory_space<vmem>>, vector<1x16x32xf32>
      tpu.vector_store %arg4[%c0_22, %c0_23, %c0_24], %21 {strides = array<i32>} : memref<1x16x32xf32, #tpu.memory_space<vmem>>, vector<1x16x32xf32>,
      %cst_25 = arith.constant 0.000000e+00 : f32
      %23 = vector.broadcast %cst_25 : f32 to vector<16x32xf32>
      %c0_26 = arith.constant 0 : index
      %c0_27 = arith.constant 0 : index
      %24 = vector.load %arg5[%c0_26, %c0_27] : memref<16x32xf32, #tpu.memory_space<vmem>>, vector<16x32xf32>
      tpu.vector_store %arg5[%c0_26, %c0_27], %23 {strides = array<i32>} : memref<16x32xf32, #tpu.memory_space<vmem>>, vector<16x32xf32>,
    } else {
    }
    %c0 = arith.constant 0 : index
    %c0_1 = arith.constant 0 : index
    %c0_2 = arith.constant 0 : index
    %3 = vector.load %arg4[%c0, %c0_1, %c0_2] : memref<1x16x32xf32, #tpu.memory_space<vmem>>, vector<1x16x32xf32>
    %4 = vector.shape_cast %3 : vector<1x16x32xf32> to vector<16x32xf32>
    %c0_3 = arith.constant 0 : index
    %c0_4 = arith.constant 0 : index
    %c0_5 = arith.constant 0 : index
    %c0_6 = arith.constant 0 : index
    %5 = vector.load %arg2[%c0_3, %c0_4, %c0_5, %c0_6] : memref<4x1x16x32xf32, #tpu.memory_space<vmem>>, vector<4x1x16x32xf32>
    %6 = vector.shape_cast %5 : vector<4x1x16x32xf32> to vector<4x16x32xf32>
    %cst = arith.constant dense<0.000000e+00> : vector<16x32xf32>
    %7 = vector.multi_reduction <add>, %6, %cst [0] : vector<4x16x32xf32> to vector<16x32xf32>
    %8 = arith.addf %4, %7 : vector<16x32xf32>
    %c0_7 = arith.constant 0 : index
    %c0_8 = arith.constant 0 : index
    %c0_9 = arith.constant 0 : index
    %9 = vector.load %arg4[%c0_7, %c0_8, %c0_9] : memref<1x16x32xf32, #tpu.memory_space<vmem>>, vector<1x16x32xf32>
    %10 = vector.shape_cast %9 : vector<1x16x32xf32> to vector<16x32xf32>
    %11 = vector.shape_cast %8 : vector<16x32xf32> to vector<1x16x32xf32>
    tpu.vector_store %arg4[%c0_7, %c0_8, %c0_9], %11 {strides = array<i32>} : memref<1x16x32xf32, #tpu.memory_space<vmem>>, vector<1x16x32xf32>,
    %c0_10 = arith.constant 0 : index
    %c0_11 = arith.constant 0 : index
    %12 = vector.load %arg5[%c0_10, %c0_11] : memref<16x32xf32, #tpu.memory_space<vmem>>, vector<16x32xf32>
    %c0_12 = arith.constant 0 : index
    %c0_13 = arith.constant 0 : index
    %c0_14 = arith.constant 0 : index
    %c0_15 = arith.constant 0 : index
    %13 = vector.load %arg3[%c0_12, %c0_13, %c0_14, %c0_15] : memref<4x1x16x32xf32, #tpu.memory_space<vmem>>, vector<4x1x16x32xf32>
    %14 = vector.shape_cast %13 : vector<4x1x16x32xf32> to vector<4x16x32xf32>
    %cst_16 = arith.constant dense<0.000000e+00> : vector<16x32xf32>
    %15 = vector.multi_reduction <add>, %14, %cst_16 [0] : vector<4x16x32xf32> to vector<16x32xf32>
    %16 = arith.addf %12, %15 : vector<16x32xf32>
    %c0_17 = arith.constant 0 : index
    %c0_18 = arith.constant 0 : index
    %17 = vector.load %arg5[%c0_17, %c0_18] : memref<16x32xf32, #tpu.memory_space<vmem>>, vector<16x32xf32>
    tpu.vector_store %arg5[%c0_17, %c0_18], %16 {strides = array<i32>} : memref<16x32xf32, #tpu.memory_space<vmem>>, vector<16x32xf32>,
    %c0_i32_19 = arith.constant 0 : i32
    %18 = arith.cmpi eq, %arg1, %c0_i32_19 : i32
    %19 = arith.extui %18 : i1 to i32
    %c0_i32_20 = arith.constant 0 : i32
    %20 = arith.cmpi ne, %19, %c0_i32_20 : i32
    scf.if %20 {
      %c0_21 = arith.constant 0 : index
      %c0_22 = arith.constant 0 : index
      %c0_23 = arith.constant 0 : index
      %21 = vector.load %arg4[%c0_21, %c0_22, %c0_23] : memref<1x16x32xf32, #tpu.memory_space<vmem>>, vector<1x16x32xf32>
      %22 = vector.shape_cast %21 : vector<1x16x32xf32> to vector<16x32xf32>
      %c0_24 = arith.constant 0 : index
      %c0_25 = arith.constant 0 : index
      %23 = vector.load %arg5[%c0_24, %c0_25] : memref<16x32xf32, #tpu.memory_space<vmem>>, vector<16x32xf32>
      %cst_26 = arith.constant 1.000000e+00 : f32
      %24 = vector.broadcast %cst_26 : f32 to vector<16x32xf32>
      %25 = arith.maximumf %23, %24 : vector<16x32xf32>
      %26 = arith.divf %22, %25 : vector<16x32xf32>
      %c0_27 = arith.constant 0 : index
      %c0_28 = arith.constant 0 : index
      %c0_29 = arith.constant 0 : index
      %27 = vector.load %arg4[%c0_27, %c0_28, %c0_29] : memref<1x16x32xf32, #tpu.memory_space<vmem>>, vector<1x16x32xf32>
      %28 = vector.shape_cast %27 : vector<1x16x32xf32> to vector<16x32xf32>
      %29 = vector.shape_cast %26 : vector<16x32xf32> to vector<1x16x32xf32>
      tpu.vector_store %arg4[%c0_27, %c0_28, %c0_29], %29 {strides = array<i32>} : memref<1x16x32xf32, #tpu.memory_space<vmem>>, vector<1x16x32xf32>,
    } else {
    }
    return
  }
  func.func @transform_0(%arg0: i32, %arg1: i32) -> (i32, i32, i32, i32) {
    %c0_i32 = arith.constant 0 : i32
    %c0_i32_0 = arith.constant 0 : i32
    %c0_i32_1 = arith.constant 0 : i32
    return %arg1, %arg0, %c0_i32, %c0_i32_0 : i32, i32, i32, i32
  }
  func.func @transform_1(%arg0: i32, %arg1: i32) -> (i32, i32, i32, i32) {
    %c0_i32 = arith.constant 0 : i32
    %c0_i32_0 = arith.constant 0 : i32
    %c0_i32_1 = arith.constant 0 : i32
    return %arg1, %arg0, %c0_i32, %c0_i32_0 : i32, i32, i32, i32
  }
  func.func @transform_2(%arg0: i32, %arg1: i32) -> (i32, i32, i32) {
    %c0_i32 = arith.constant 0 : i32
    %c0_i32_0 = arith.constant 0 : i32
    %c0_i32_1 = arith.constant 0 : i32
    return %arg0, %c0_i32, %c0_i32_0 : i32, i32, i32
  }
}

</mosaic_0001>

<llo_original>
// kernel: tpu_custom_call.1
$region0: #{tpu_custom_call.1}
  #allocation0 [shape = 'u32[]', space=smem, size = 0x4, offset = 0x4, fixed_abs, tag = 'smem constant byte address 0x4 - core index']
  #allocation1 [shape = 'u32[144,128]{1,0:T(1,128)}', space=vmem, size = 0x12000, scoped, tag = 'internal scratch']
  #allocation2 [shape = 'f32[16,32]{1,0:T(8,128)}', space=vmem, size = 0x2000, scoped, tag = 'scratch operand']
  #allocation9 [shape = 's32[]', space=sflag, size = 0x4, offset = 0, fixed_abs, tag = 'sflag constant byte address 0x0 - dummy sync flag']
  #allocation11 [shape = 's32[]', space=sflag, size = 0x4, offset = 0, fixed_abs, tag = 'sflag constant byte address 0x0 - dummy sync flag']
  %s0 = inlined_call_operand.hbm [shape: f32[4,4,16,32], index: 0, kind: input, shape index: {}]
  %s1 = inlined_call_operand.hbm [shape: f32[4,4,16,32], index: 1, kind: input, shape index: {}]
  %s2 = inlined_call_operand.hbm [shape: f32[4,16,32], index: 2, kind: output, shape index: {}]
  %s3 = sld [smem:[#allocation0]]
  $region57: #{tpu_custom_call.1} parent=0
    _
  %s5 = ssub.s32 1, %s3
  %s6 = scalar_select 0, %s5, %s3
  $region1: #{tpu_custom_call.1} parent=0
    #allocation3 [shape = 'u8[65536]{0}', space=vmem, size = 0x10000, scoped, tag = 'input window, operand 0']
    #allocation4 [shape = 's32[2]{0}', space=sflag, size = 0x8, scoped, tag = 'scoped memory for tpu_custom_call.1']
    #allocation5 [shape = 's32[2]{0}', space=sflag, size = 0x8, scoped, tag = 'scoped memory for tpu_custom_call.1']
    #allocation6 [shape = 'u8[65536]{0}', space=vmem, size = 0x10000, scoped, tag = 'input window, operand 1']
    #allocation7 [shape = 's32[2]{0}', space=sflag, size = 0x8, scoped, tag = 'scoped memory for tpu_custom_call.1']
    #allocation8 [shape = 'u8[16384]{0}', space=vmem, size = 0x4000, scoped, tag = 'output window, operand 0']
    %7 = vsyncpa [#allocation4], 0
    %s8 = scalar_lea.sflag [#allocation4], 1
    %9 = vsyncpa %s8, 0
    %10 = vsyncpa [#allocation7], 0
    %s11 = scalar_lea.sflag [#allocation7], 1
    %12 = vsyncpa %s11, 0
    %13 = vsyncpa [#allocation5], 0
    %s14 = scalar_lea.sflag [#allocation5], 1
    %15 = vsyncpa %s14, 0
    loop: start=0, step=1, limit=6
    $region2: #{tpu_custom_call.1} parent=1 // loop_pre_header
      _
    $region3: #{tpu_custom_call.1} parent=1 // loop_header
      %s17 = sphi 0, %s21
      %p18 = scmp.ge.s32.totalorder %s17, 6
      %s24 = sphi 0, %s36
      %s25 = sphi 0, %s32
      %s26 = sphi 0, %s24
      %s27 = sphi 0, %s25
      %s28 = sphi 0, %s26
      %s29 = sphi 0, %s27
      %s41 = sphi 0, %s43
      %s44 = sphi 0, %s41
      %s45 = sphi 0, %s44
      %s61 = sphi 0, %s45
      %s69 = sphi 0, %s71
      %s72 = sphi 0, %s69
      %s73 = sphi 0, %s72
      %s89 = sphi 0, %s73
      %s95 = sphi 0, %s97
      %s98 = sphi 0, %s95
      %s99 = sphi 0, %s98
      %s115 = sphi 0, %s99
    $region4: #{tpu_custom_call.1} parent=1 // loop_header_branch
      %20 = sbr.rel (%p18) target = $region8
    $region5: #{tpu_custom_call.1} parent=1 // loop_body
      %s22 = ssub.s32 %s17, 1
      %s23 = ssub.s32 %s17, 2
      %s30 = sadd.s32 1, %s25
      %p31 = scmp.ge.s32.totalorder %s30, 1
      %s32 = scalar_select %p31, 0, %s30
      %s33 = sadd.s32 1, %s24
      %s34 = scalar_select %p31, %s33, %s24
      %p35 = scmp.ge.s32.totalorder %s34, 4
      %s36 = scalar_select %p35, 0, %s34
      %s37 = ssub.s32 %s25, %s32
      %s38 = ssub.s32 %s24, %s36
      %s39 = sor.u32 %s37, %s38
      %p40 = scmp.eq.s32.totalorder %s39, 0
      %s42 = sadd.s32 %s41, 1
      %s43 = scalar_select %p40, %s41, %s42
      %p46 = pneg %p40
      %p47 = scmp.eq.s32.totalorder %s17, 3
      %p48 = por %p46, %p47
      %p49 = scmp.ne.s32.totalorder %s41, %s44
      %p50 = scmp.eq.s32.totalorder %s17, 0
      %p51 = por %p49, %p50
      %p52 = scmp.ne.s32.totalorder %s41, %s44
      %p53 = scmp.eq.s32.totalorder %s22, 3
      %p54 = por %p52, %p53
      %p55 = scmp.ne.s32.totalorder %s44, %s45
      %p56 = scmp.eq.s32.totalorder %s22, 0
      %p57 = por %p55, %p56
      %p58 = scmp.ne.s32.totalorder %s44, %s45
      %p59 = scmp.eq.s32.totalorder %s23, 3
      %p60 = por %p58, %p59
      %p62 = scmp.ne.s32.totalorder %s45, %s61
      %p63 = scmp.eq.s32.totalorder %s23, 0
      %p64 = por %p62, %p63
      %s65 = ssub.s32 %s25, %s32
      %s66 = ssub.s32 %s24, %s36
      %s67 = sor.u32 %s65, %s66
      %p68 = scmp.eq.s32.totalorder %s67, 0
      %s70 = sadd.s32 %s69, 1
      %s71 = scalar_select %p68, %s69, %s70
      %p74 = pneg %p68
      %p75 = scmp.eq.s32.totalorder %s17, 3
      %p76 = por %p74, %p75
      %p77 = scmp.ne.s32.totalorder %s69, %s72
      %p78 = scmp.eq.s32.totalorder %s17, 0
      %p79 = por %p77, %p78
      %p80 = scmp.ne.s32.totalorder %s69, %s72
      %p81 = scmp.eq.s32.totalorder %s22, 3
      %p82 = por %p80, %p81
      %p83 = scmp.ne.s32.totalorder %s72, %s73
      %p84 = scmp.eq.s32.totalorder %s22, 0
      %p85 = por %p83, %p84
      %p86 = scmp.ne.s32.totalorder %s72, %s73
      %p87 = scmp.eq.s32.totalorder %s23, 3
      %p88 = por %p86, %p87
      %p90 = scmp.ne.s32.totalorder %s73, %s89
      %p91 = scmp.eq.s32.totalorder %s23, 0
      %p92 = por %p90, %p91
      %s93 = ssub.s32 %s24, %s36
      %p94 = scmp.eq.s32.totalorder %s93, 0
      %s96 = sadd.s32 %s95, 1
      %s97 = scalar_select %p94, %s95, %s96
      %p100 = pneg %p94
      %p101 = scmp.eq.s32.totalorder %s17, 3
      %p102 = por %p100, %p101
      %p103 = scmp.ne.s32.totalorder %s95, %s98
      %p104 = scmp.eq.s32.totalorder %s17, 0
      %p105 = por %p103, %p104
      %p106 = scmp.ne.s32.totalorder %s95, %s98
      %p107 = scmp.eq.s32.totalorder %s22, 3
      %p108 = por %p106, %p107
      %p109 = scmp.ne.s32.totalorder %s98, %s99
      %p110 = scmp.eq.s32.totalorder %s22, 0
      %p111 = por %p109, %p110
      %p112 = scmp.ne.s32.totalorder %s98, %s99
      %p113 = scmp.eq.s32.totalorder %s23, 3
      %p114 = por %p112, %p113
      %p116 = scmp.ne.s32.totalorder %s99, %s115
      %p117 = scmp.eq.s32.totalorder %s23, 0
      %p118 = por %p116, %p117
      %p119 = scmp.le.s32.totalorder 1, %s17
      %p120 = scmp.lt.s32.totalorder %s17, 5
      %p121 = pnand %p119, %p120
      %p122 = pneg %p121
      // Predicated region
      $region9: #{tpu_custom_call.1} parent=5 // pred_check
        _
      $region10: #{tpu_custom_call.1} parent=5 // pred_check_branch
        %124 = sbr.rel (%p121) target = $region12
      $region11: #{tpu_custom_call.1} parent=5 // pred_region
        %s125 = ssub.s32 %s17, 1
      $region12: #{tpu_custom_call.1} parent=5 // pred_fallthru
        _
      %p126 = scmp.lt.s32.totalorder %s17, 4
      // Predicated region
      $region13: #{tpu_custom_call.1} parent=5 // pred_check
        %p127 = pneg %p126
      $region14: #{tpu_custom_call.1} parent=5 // pred_check_branch
        %129 = sbr.rel (%p127) target = $region16
      $region15: #{tpu_custom_call.1} parent=5 // pred_region
        // Predicated region
        $region17: #{tpu_custom_call.1} parent=15 // pred_check
          %p130 = pneg %p51
        $region18: #{tpu_custom_call.1} parent=15 // pred_check_branch
          %132 = sbr.rel (%p130) target = $region20
        $region19: #{tpu_custom_call.1} parent=15 // pred_region
          #allocation10 [shape = 'u32[6]{0}', space=smem, size = 0x18, scoped, tag = 'DMA stride descriptor']
          %s133 = sand.u32 %s41, 1
          %s134 = scalar_lea.sflag [#allocation4], %s133
          %s135 = sand.u32 %s41, 1
          %s136 = smul.addr %s135, 64
          %s137 = scalar_lea.vmem [#allocation3], %s136
          %s138 = smul.u32 4, %s25
          %s140 = ssub.s32 1024, 1024
          %141 = vsyncadd %s134, %s140
          %s142 = smul.addr %s24, 2
          %s143 = smul.addr %s138, 8
          %s144 = sadd.s32 %s142, %s143
          %s145 = smul.addr %s144, 128
          %s146 = scalar_lea.hbm %s0, %s145
          %s148 = sshll.u32 1, 14
          %s149 = sxor.u32 4294967295, %s148
          %s151 = sld [smem:[#allocation0]]
          %s152 = sadd.s32 2, %s151
          %s154 = sshll.u32 7, 26
          %s155 = sxor.u32 4294967295, %s154
          %s156 = sand.u32 0, %s155
          %s157 = sshll.u32 %s152, 26
          %s158 = sor.u32 %s156, %s157
          %s159 = sshll.u32 %s137, 4
          %s160 = int_to_ptr.vmem [resolvable:$true] %s159
          %166 = sst [smem:[#allocation10]] 1024
          %s167 = scalar_lea.smem [#allocation10], 1
          %168 = sst [smem:[%s167]] 256
          %s169 = scalar_lea.smem [#allocation10], 2
          %170 = sst [smem:[%s169]] 2
          %s171 = scalar_lea.smem [#allocation10], 3
          %172 = sst [smem:[%s171]] 128
          %s173 = scalar_lea.smem [#allocation10], 4
          %174 = sst [smem:[%s173]] 128
          %s175 = scalar_lea.smem [#allocation10], 5
          %176 = sst [smem:[%s175]] 8
          %178 = dma.general %s146, 1024, %s160, %s134, 131072, [#allocation10], %s158, 0
        $region20: #{tpu_custom_call.1} parent=15 // pred_fallthru
          _
        // Predicated region
        $region21: #{tpu_custom_call.1} parent=15 // pred_check
          %p179 = pneg %p79
        $region22: #{tpu_custom_call.1} parent=15 // pred_check_branch
          %181 = sbr.rel (%p179) target = $region24
        $region23: #{tpu_custom_call.1} parent=15 // pred_region
          #allocation12 [shape = 'u32[6]{0}', space=smem, size = 0x18, scoped, tag = 'DMA stride descriptor']
          %s182 = sand.u32 %s69, 1
          %s183 = scalar_lea.sflag [#allocation7], %s182
          %s184 = sand.u32 %s69, 1
          %s185 = smul.addr %s184, 64
          %s186 = scalar_lea.vmem [#allocation6], %s185
          %s187 = smul.u32 4, %s25
          %s189 = ssub.s32 1024, 1024
          %190 = vsyncadd %s183, %s189
          %s191 = smul.addr %s24, 2
          %s192 = smul.addr %s187, 8
          %s193 = sadd.s32 %s191, %s192
          %s194 = smul.addr %s193, 128
          %s195 = scalar_lea.hbm %s1, %s194
          %s197 = sshll.u32 1, 14
          %s198 = sxor.u32 4294967295, %s197
          %s200 = sld [smem:[#allocation0]]
          %s201 = sadd.s32 2, %s200
          %s203 = sshll.u32 7, 26
          %s204 = sxor.u32 4294967295, %s203
          %s205 = sand.u32 0, %s204
          %s206 = sshll.u32 %s201, 26
          %s207 = sor.u32 %s205, %s206
          %s208 = sshll.u32 %s186, 4
          %s209 = int_to_ptr.vmem [resolvable:$true] %s208
          %215 = sst [smem:[#allocation12]] 1024
          %s216 = scalar_lea.smem [#allocation12], 1
          %217 = sst [smem:[%s216]] 256
          %s218 = scalar_lea.smem [#allocation12], 2
          %219 = sst [smem:[%s218]] 2
          %s220 = scalar_lea.smem [#allocation12], 3
          %221 = sst [smem:[%s220]] 128
          %s222 = scalar_lea.smem [#allocation12], 4
          %223 = sst [smem:[%s222]] 128
          %s224 = scalar_lea.smem [#allocation12], 5
          %225 = sst [smem:[%s224]] 8
          %227 = dma.general %s195, 1024, %s209, %s183, 131072, [#allocation12], %s207, 0
        $region24: #{tpu_custom_call.1} parent=15 // pred_fallthru
          _
      $region16: #{tpu_custom_call.1} parent=5 // pred_fallthru
        _
      %p228 = scmp.le.s32.totalorder 1, %s17
      %p229 = scmp.lt.s32.totalorder %s17, 5
      %p230 = pnand %p228, %p229
      %p231 = pneg %p230
      // Predicated region
      $region25: #{tpu_custom_call.1} parent=5 // pred_check
        _
      $region26: #{tpu_custom_call.1} parent=5 // pred_check_branch
        %233 = sbr.rel (%p230) target = $region28
      $region27: #{tpu_custom_call.1} parent=5 // pred_region
        %s234 = ssub.s32 %s17, 1
        %s235 = sand.u32 %s44, 1
        %s236 = scalar_lea.sflag [#allocation4], %s235
        %s237 = sand.u32 %s44, 1
        %s238 = smul.addr %s237, 64
        %s239 = scalar_lea.vmem [#allocation3], %s238
        // Predicated region
        $region29: #{tpu_custom_call.1} parent=27 // pred_check
          %p240 = pneg %p57
        $region30: #{tpu_custom_call.1} parent=27 // pred_check_branch
          %242 = sbr.rel (%p240) target = $region32
        $region31: #{tpu_custom_call.1} parent=27 // pred_region
          %243 = dma.done %s236, 1024
        $region32: #{tpu_custom_call.1} parent=27 // pred_fallthru
          _
        %s244 = sand.u32 %s72, 1
        %s245 = scalar_lea.sflag [#allocation7], %s244
        %s246 = sand.u32 %s72, 1
        %s247 = smul.addr %s246, 64
        %s248 = scalar_lea.vmem [#allocation6], %s247
        // Predicated region
        $region33: #{tpu_custom_call.1} parent=27 // pred_check
          %p249 = pneg %p85
        $region34: #{tpu_custom_call.1} parent=27 // pred_check_branch
          %251 = sbr.rel (%p249) target = $region36
        $region35: #{tpu_custom_call.1} parent=27 // pred_region
          %252 = dma.done %s245, 1024
        $region36: #{tpu_custom_call.1} parent=27 // pred_fallthru
          _
        %s253 = sand.u32 %s44, 1
        %s254 = scalar_lea.sflag [#allocation4], %s253
        %s255 = sand.u32 %s44, 1
        %s256 = smul.addr %s255, 64
        %s257 = scalar_lea.vmem [#allocation3], %s256
        %p258 = pneg %p57
        %p259 = pneg %p54
        %s260 = sand.u32 %s72, 1
        %s261 = scalar_lea.sflag [#allocation7], %s260
        %s262 = sand.u32 %s72, 1
        %s263 = smul.addr %s262, 64
        %s264 = scalar_lea.vmem [#allocation6], %s263
        %p265 = pneg %p85
        %p266 = pneg %p82
        %p267 = pneg %p111
        %p268 = pneg %p108
        %s269 = sand.u32 %s98, 1
        %s270 = scalar_lea.sflag [#allocation5], %s269
        %s271 = sand.u32 %s98, 1
        %s272 = smul.addr %s271, 16
        %s273 = scalar_lea.vmem [#allocation8], %s272
        %s274 = smul.u32 4, %s27
        %s275 = smul.u32 4, %s27
        %p276 = scmp.eq.s32.totalorder %s27, 0
        // Predicated region
        $region37: #{tpu_custom_call.1} parent=27 // pred_check
          %p277 = pneg %p276
        $region38: #{tpu_custom_call.1} parent=27 // pred_check_branch
          %279 = sbr.rel (%p277) target = $region40
        $region39: #{tpu_custom_call.1} parent=27 // pred_region
          %vm280 = vcmask 261120
          %281 = vst.msk [vmem:[%s273] sm:$0xff] %vm280, 0.0
          %282 = vst.msk [vmem:[%s273 + $0x8] sm:$0xff] %vm280, 0.0
          %283 = vst.msk [vmem:[#allocation2] sm:$0xff] %vm280, 0.0
          %284 = vst.msk [vmem:[#allocation2 + $0x8] sm:$0xff] %vm280, 0.0
        $region40: #{tpu_custom_call.1} parent=27 // pred_fallthru
          _
        %v285 = vld [vmem:[%s273] sm:$0xff]
        %v286 = vld [vmem:[%s273 + $0x8] sm:$0xff]
        %v287 = vld [vmem:[%s239] sm:$0xff]
        %v288 = vld [vmem:[%s239 + $0x8] sm:$0xff]
        %v289 = vld [vmem:[%s239 + $0x10] sm:$0xff]
        %v290 = vld [vmem:[%s239 + $0x18] sm:$0xff]
        %v291 = vld [vmem:[%s239 + $0x20] sm:$0xff]
        %v292 = vld [vmem:[%s239 + $0x28] sm:$0xff]
        %v293 = vld [vmem:[%s239 + $0x30] sm:$0xff]
        %v294 = vld [vmem:[%s239 + $0x38] sm:$0xff]
        %vm295 = vcmask 261120
        %v296 = vsel %vm295, %v287, 0.0
        %v297 = vsel %vm295, %v289, 0.0
        %v298 = vadd.f32 %v296, %v297
        %v299 = vsel %vm295, %v291, 0.0
        %v300 = vadd.f32 %v298, %v299
        %v301 = vsel %vm295, %v293, 0.0
        %v302 = vadd.f32 %v300, %v301
        %v303 = vsel %vm295, %v288, 0.0
        %v304 = vsel %vm295, %v290, 0.0
        %v305 = vadd.f32 %v303, %v304
        %v306 = vsel %vm295, %v292, 0.0
        %v307 = vadd.f32 %v305, %v306
        %v308 = vsel %vm295, %v294, 0.0
        %v309 = vadd.f32 %v307, %v308
        %v310 = vadd.f32 %v285, %v302
        %v311 = vadd.f32 %v286, %v309
        %312 = vst.msk [vmem:[%s273] sm:$0xff] %vm295, %v310
        %313 = vst.msk [vmem:[%s273 + $0x8] sm:$0xff] %vm295, %v311
        %v314 = vld [vmem:[#allocation2] sm:$0xff]
        %v315 = vld [vmem:[#allocation2 + $0x8] sm:$0xff]
        %v316 = vld [vmem:[%s248] sm:$0xff]
        %v317 = vld [vmem:[%s248 + $0x8] sm:$0xff]
        %v318 = vld [vmem:[%s248 + $0x10] sm:$0xff]
        %v319 = vld [vmem:[%s248 + $0x18] sm:$0xff]
        %v320 = vld [vmem:[%s248 + $0x20] sm:$0xff]
        %v321 = vld [vmem:[%s248 + $0x28] sm:$0xff]
        %v322 = vld [vmem:[%s248 + $0x30] sm:$0xff]
        %v323 = vld [vmem:[%s248 + $0x38] sm:$0xff]
        %v324 = vsel %vm295, %v316, 0.0
        %v325 = vsel %vm295, %v318, 0.0
        %v326 = vadd.f32 %v324, %v325
        %v327 = vsel %vm295, %v320, 0.0
        %v328 = vadd.f32 %v326, %v327
        %v329 = vsel %vm295, %v322, 0.0
        %v330 = vadd.f32 %v328, %v329
        %v331 = vsel %vm295, %v317, 0.0
        %v332 = vsel %vm295, %v319, 0.0
        %v333 = vadd.f32 %v331, %v332
        %v334 = vsel %vm295, %v321, 0.0
        %v335 = vadd.f32 %v333, %v334
        %v336 = vsel %vm295, %v323, 0.0
        %v337 = vadd.f32 %v335, %v336
        %v338 = vadd.f32 %v314, %v330
        %v339 = vadd.f32 %v315, %v337
        %340 = vst.msk [vmem:[#allocation2] sm:$0xff] %vm295, %v338
        %341 = vst.msk [vmem:[#allocation2 + $0x8] sm:$0xff] %vm295, %v339
        // Predicated region
        $region41: #{tpu_custom_call.1} parent=27 // pred_check
          %p342 = pneg %p276
        $region42: #{tpu_custom_call.1} parent=27 // pred_check_branch
          %344 = sbr.rel (%p342) target = $region44
        $region43: #{tpu_custom_call.1} parent=27 // pred_region
          %v345 = vld [vmem:[%s273] sm:$0xff]
          %v346 = vld [vmem:[%s273 + $0x8] sm:$0xff]
          %v347 = vld [vmem:[#allocation2] sm:$0xff]
          %v348 = vld [vmem:[#allocation2 + $0x8] sm:$0xff]
          %v349 = vmax.f32 %v347, 1.0
          %v350 = vmax.f32 %v348, 1.0
          %v351 = vrcp.pop %v349
          %v352 = vmul.f32 %v345, %v351
          %v353 = vrcp.pop %v350
          %v354 = vmul.f32 %v346, %v353
          %355 = vst.msk [vmem:[%s273] sm:$0xff] %vm295, %v352
          %356 = vst.msk [vmem:[%s273 + $0x8] sm:$0xff] %vm295, %v354
        $region44: #{tpu_custom_call.1} parent=27 // pred_fallthru
          _
        %s357 = sand.u32 %s98, 1
        %s358 = scalar_lea.sflag [#allocation5], %s357
        %s359 = sand.u32 %s98, 1
        %s360 = smul.addr %s359, 16
        %s361 = scalar_lea.vmem [#allocation8], %s360
        // Predicated region
        $region45: #{tpu_custom_call.1} parent=27 // pred_check
          %p362 = pneg %p108
        $region46: #{tpu_custom_call.1} parent=27 // pred_check_branch
          %364 = sbr.rel (%p362) target = $region48
        $region47: #{tpu_custom_call.1} parent=27 // pred_region
          %s366 = ssub.s32 256, 256
          %367 = vsyncadd %s358, %s366
          %s368 = smul.addr %s26, 2
          %s369 = smul.addr %s368, 128
          %s370 = scalar_lea.hbm %s2, %s369
          %s371 = sshll.u32 %s361, 4
          %s372 = int_to_ptr.vmem [resolvable:$true] %s371
          %377 = dma.vmem_to_hbm [thread:$0]  %s372, 256, %s370, %s358, 128, 128, 8
        $region48: #{tpu_custom_call.1} parent=27 // pred_fallthru
          _
      $region28: #{tpu_custom_call.1} parent=5 // pred_fallthru
        _
      %p378 = scmp.le.s32.totalorder 2, %s17
      // Predicated region
      $region49: #{tpu_custom_call.1} parent=5 // pred_check
        %p379 = pneg %p378
      $region50: #{tpu_custom_call.1} parent=5 // pred_check_branch
        %381 = sbr.rel (%p379) target = $region52
      $region51: #{tpu_custom_call.1} parent=5 // pred_region
        %s382 = ssub.s32 %s17, 2
        // Predicated region
        $region53: #{tpu_custom_call.1} parent=51 // pred_check
          %p383 = pneg %p114
        $region54: #{tpu_custom_call.1} parent=51 // pred_check_branch
          %385 = sbr.rel (%p383) target = $region56
        $region55: #{tpu_custom_call.1} parent=51 // pred_region
          %s386 = sand.u32 %s99, 1
          %s387 = scalar_lea.sflag [#allocation5], %s386
          %s388 = sand.u32 %s99, 1
          %s389 = smul.addr %s388, 16
          %s390 = scalar_lea.vmem [#allocation8], %s389
          %391 = dma.done %s387, 256
        $region56: #{tpu_custom_call.1} parent=51 // pred_fallthru
          _
      $region52: #{tpu_custom_call.1} parent=5 // pred_fallthru
        _
    $region6: #{tpu_custom_call.1} parent=1 // loop_footer
      %s21 = sadd.s32 1, %s17
    $region7: #{tpu_custom_call.1} parent=1 // loop_footer_branch
      %16 = sbr.rel target = $region3
    $region8: #{tpu_custom_call.1} parent=1 // loop_exit
      _
    %392 = vsyncpa [#allocation4], 1
    %s393 = scalar_lea.sflag [#allocation4], 1
    %394 = vsyncpa %s393, 1
    %395 = vsyncpa [#allocation7], 1
    %s396 = scalar_lea.sflag [#allocation7], 1
    %397 = vsyncpa %s396, 1
    %398 = vsyncpa [#allocation5], 1
    %s399 = scalar_lea.sflag [#allocation5], 1
    %400 = vsyncpa %s399, 1

</llo_original>
